<compile_context>
chip_gen: v5e
topology: v5e:2x2
jax: 0.10.0
libtpu: 0.0.40
codegen_flags: <defaults>
</compile_context>

<pallas_src>
import jax
import jax.numpy as jnp
from jax.experimental import pallas as pl
from jax.experimental.pallas import tpu as pltpu

IN_DIM = 28 * 28            # 784
OUT_DIM = 62
OUT_PAD = 128               # lane-dense output width
LAYER_DIMS = [(IN_DIM, 256), (256, 128), (128, 128), (128, 64), (64, OUT_DIM)]

TM_MAX = 1024               # batch-tile rows for large batches


def _round_up(x, m):
    return (x + m - 1) // m * m


def _mlp_kernel(x_ref,
                w1_ref, b1_ref,
                w2_ref, b2_ref,
                w3_ref, b3_ref,
                w4_ref, b4_ref,
                w5_ref, b5_ref,
                out_ref):
    # x_ref: (TM, 784) f32; weights bf16; biases f32 (1, N); out_ref: (TM, 128) f32.
    # Downcast activations to bf16 inside the kernel (no host-side cast pass).
    h = x_ref[...].astype(jnp.bfloat16)

    # Layer 1: 784 -> 256
    h = jnp.dot(h, w1_ref[...], preferred_element_type=jnp.float32) + b1_ref[...]
    h = jnp.maximum(h, 0.0).astype(jnp.bfloat16)

    # Layer 2: 256 -> 128
    h = jnp.dot(h, w2_ref[...], preferred_element_type=jnp.float32) + b2_ref[...]
    h = jnp.maximum(h, 0.0).astype(jnp.bfloat16)

    # Layer 3: 128 -> 128
    h = jnp.dot(h, w3_ref[...], preferred_element_type=jnp.float32) + b3_ref[...]
    h = jnp.maximum(h, 0.0).astype(jnp.bfloat16)

    # Layer 4: 128 -> 64
    h = jnp.dot(h, w4_ref[...], preferred_element_type=jnp.float32) + b4_ref[...]
    h = jnp.maximum(h, 0.0).astype(jnp.bfloat16)

    # Output layer (zero-padded to 128 lanes): no activation (logits).
    out = jnp.dot(h, w5_ref[...], preferred_element_type=jnp.float32) + b5_ref[...]
    out_ref[...] = out.astype(out_ref.dtype)


def init_params(key):
    """Deterministic init matching nn.Linear: weight (out, in) f32, bias (out,) f32."""
    params = []
    for (fan_in, fan_out) in LAYER_DIMS:
        key, kw, kb = jax.random.split(key, 3)
        bound = 1.0 / jnp.sqrt(fan_in)
        w = jax.random.uniform(kw, (fan_out, fan_in), jnp.float32, -bound, bound)
        b = jax.random.uniform(kb, (fan_out,), jnp.float32, -bound, bound)
        params.append((w, b))
    return params


def prepare_params(params):
    """One-time weight prep (at init, NOT per forward call):
       transpose to (in, out), cast weights to bf16, zero-pad the output layer
       (62 -> 128 lanes). No K padding on w1 (input stays at 784)."""
    prepped = []
    n = len(params)
    for i, (w, b) in enumerate(params):
        wt = jnp.asarray(w, jnp.float32).T           # (in, out)
        bb = jnp.asarray(b, jnp.float32)
        if i == n - 1:
            wt = jnp.pad(wt, ((0, 0), (0, OUT_PAD - OUT_DIM)))
            bb = jnp.pad(bb, (0, OUT_PAD - OUT_DIM))
        prepped.append((wt.astype(jnp.bfloat16), bb.reshape(1, -1)))
    return prepped


def net_forward(img, prepped_params):
    """img: (B, 1, 28, 28) f32 (NCHW). prepped_params: from prepare_params().
       Returns (B, 62) f32 logits."""
    x = img.reshape(-1, IN_DIM)                      # == img.view(-1, 784), f32
    n_rows = x.shape[0]

    # Tile selection:
    #   * large batches: TM = TM_MAX (amortizes per-grid-step overhead,
    #     ~8.5 MB resident set -> fits v5e's 16 MiB scoped default).
    #   * small/medium batches: split into >= 2 grid steps when possible so the
    #     "parallel" batch axis uses both TensorCores on v7x.
    if n_rows >= 2 * TM_MAX:
        TM = TM_MAX
    else:
        TM = max(8, _round_up(pl.cdiv(n_rows, 2), 8))
        TM = min(TM, TM_MAX)
    padded = _round_up(n_rows, TM)

    # Only row padding (zeros), no dtype cast and no K padding. No-op when
    # padded == n_rows.
    if padded != n_rows:
        x = jnp.pad(x, ((0, padded - n_rows), (0, 0)))

    (w1, b1), (w2, b2), (w3, b3), (w4, b4), (w5, b5) = prepped_params
    args = (x, w1, b1, w2, b2, w3, b3, w4, b4, w5, b5)

    grid = (padded // TM,)

    def const_spec(a):
        # Full-array block, constant block index -> stays resident in VMEM.
        return pl.BlockSpec(a.shape, lambda i: (0,) * a.ndim)

    in_specs = [pl.BlockSpec((TM, IN_DIM), lambda i: (i, 0))] + \
               [const_spec(a) for a in args[1:]]
    out_specs = pl.BlockSpec((TM, OUT_PAD), lambda i: (i, 0))

    # Honest scheduler hint: real K (784), f32 input traffic, padded f32 output.
    flops_per_row = 2 * (IN_DIM * 256 + 256 * 128 + 128 * 128 + 128 * 64 + 64 * OUT_PAD)
    bytes_accessed = int(sum(a.size * a.dtype.itemsize for a in args)
                         + padded * OUT_PAD * 4)
    cost = pl.CostEstimate(flops=int(flops_per_row) * int(padded),
                           transcendentals=0,
                           bytes_accessed=bytes_accessed)

    out = pl.pallas_call(
        _mlp_kernel,
        out_shape=jax.ShapeDtypeStruct((padded, OUT_PAD), jnp.float32),
        grid=grid,
        in_specs=in_specs,
        out_specs=out_specs,
        compiler_params=pltpu.CompilerParams(
            dimension_semantics=("parallel",),        # megacore split on v7x
            vmem_limit_bytes=32 * 1024 * 1024,        # safe on v5e/v6e/v7x
        ),
        cost_estimate=cost,
    )(*args)

    return out[:n_rows, :OUT_DIM]


# TODO(synk): Net.predict()'s torchvision transform + softmax/argmax/dict lookup is
# host-side pre/post-processing, not part of the forward pass kernel.


if __name__ == "__main__":
    key = jax.random.PRNGKey(0)
    key, kimg = jax.random.split(key)

    params = init_params(key)           # PyTorch-layout params (out,in)/(out,)
    prepped = prepare_params(params)    # one-time transpose/bf16/pad

    # Small batch of "images": (B=2, C=1, H=28, W=28), normalized-ish range.
    img = jax.random.uniform(kimg, (2, 1, 28, 28), jnp.float32, -1.0, 1.0)

    logits = net_forward(img, prepped)
    jax.block_until_ready(logits)

    assert logits.shape == (2, 62), logits.shape
    assert logits.dtype == jnp.float32

    # Reference in plain JAX with the SAME bf16 quantization points as the kernel
    # (bf16 input/weights/activations, f32 accumulation) to validate semantics.
    def ref_forward(img, params):
        h = img.reshape(-1, IN_DIM).astype(jnp.bfloat16).astype(jnp.float32)
        for i, (w, b) in enumerate(params):
            wq = w.astype(jnp.bfloat16).astype(jnp.float32)
            h = h @ wq.T + b
            if i < len(params) - 1:
                h = jnp.maximum(h, 0.0).astype(jnp.bfloat16).astype(jnp.float32)
        return h

    ref = ref_forward(img, params)
    assert jnp.allclose(logits, ref, atol=1e-2, rtol=1e-2), (
        float(jnp.max(jnp.abs(logits - ref))))

    print("KERNEL_OK")
</pallas_src>

<mosaic_0001>
module attributes {stable_mosaic.version = 11 : i64} {
  func.func @_mlp_kernel(%arg0: i32, %arg1: memref<8x784xf32, #tpu.memory_space<vmem>>, %arg2: memref<784x256xbf16, #tpu.memory_space<vmem>>, %arg3: memref<1x256xf32, #tpu.memory_space<vmem>>, %arg4: memref<256x128xbf16, #tpu.memory_space<vmem>>, %arg5: memref<1x128xf32, #tpu.memory_space<vmem>>, %arg6: memref<128x128xbf16, #tpu.memory_space<vmem>>, %arg7: memref<1x128xf32, #tpu.memory_space<vmem>>, %arg8: memref<128x64xbf16, #tpu.memory_space<vmem>>, %arg9: memref<1x64xf32, #tpu.memory_space<vmem>>, %arg10: memref<64x128xbf16, #tpu.memory_space<vmem>>, %arg11: memref<1x128xf32, #tpu.memory_space<vmem>>, %arg12: memref<8x128xf32, #tpu.memory_space<vmem>>) attributes {dimension_semantics = [#tpu.dimension_semantics<parallel>], iteration_bounds = array<i64: 1>, scalar_prefetch = 0 : i64, scratch_operands = 0 : i64, tpu.core_type = #tpu.core_type<tc>, window_params = [{transform_indices = @transform_0, window_bounds = array<i64: 8, 784>}, {pipeline_mode = #tpu.pipeline_mode<synchronous>, transform_indices = @transform_1, window_bounds = array<i64: 784, 256>}, {pipeline_mode = #tpu.pipeline_mode<synchronous>, transform_indices = @transform_2, window_bounds = array<i64: 1, 256>}, {pipeline_mode = #tpu.pipeline_mode<synchronous>, transform_indices = @transform_3, window_bounds = array<i64: 256, 128>}, {pipeline_mode = #tpu.pipeline_mode<synchronous>, transform_indices = @transform_4, window_bounds = array<i64: 1, 128>}, {pipeline_mode = #tpu.pipeline_mode<synchronous>, transform_indices = @transform_5, window_bounds = array<i64: 128, 128>}, {pipeline_mode = #tpu.pipeline_mode<synchronous>, transform_indices = @transform_6, window_bounds = array<i64: 1, 128>}, {pipeline_mode = #tpu.pipeline_mode<synchronous>, transform_indices = @transform_7, window_bounds = array<i64: 128, 64>}, {pipeline_mode = #tpu.pipeline_mode<synchronous>, transform_indices = @transform_8, window_bounds = array<i64: 1, 64>}, {pipeline_mode = #tpu.pipeline_mode<synchronous>, transform_indices = @transform_9, window_bounds = array<i64: 64, 128>}, {pipeline_mode = #tpu.pipeline_mode<synchronous>, transform_indices = @transform_10, window_bounds = array<i64: 1, 128>}, {transform_indices = @transform_11, window_bounds = array<i64: 8, 128>}]} {
    %c0 = arith.constant 0 : index
    %c0_0 = arith.constant 0 : index
    %0 = vector.load %arg1[%c0, %c0_0] : memref<8x784xf32, #tpu.memory_space<vmem>>, vector<8x784xf32>
    %1 = arith.truncf %0 : vector<8x784xf32> to vector<8x784xbf16>
    %c0_1 = arith.constant 0 : index
    %c0_2 = arith.constant 0 : index
    %2 = vector.load %arg2[%c0_1, %c0_2] : memref<784x256xbf16, #tpu.memory_space<vmem>>, vector<784x256xbf16>
    %cst = arith.constant dense<0.000000e+00> : vector<8x256xf32>
    %3 = tpu.matmul %1, %2, %cst {dimension_numbers = #tpu.dot_dimension_numbers<[1], [0], [0], [1], [0, 0, 1, 1], [], []>} : vector<8x784xbf16>, vector<784x256xbf16>, vector<8x256xf32> -> vector<8x256xf32>
    %c0_3 = arith.constant 0 : index
    %c0_4 = arith.constant 0 : index
    %4 = vector.load %arg3[%c0_3, %c0_4] : memref<1x256xf32, #tpu.memory_space<vmem>>, vector<1x256xf32>
    %5 = vector.broadcast %4 : vector<1x256xf32> to vector<8x256xf32>
    %6 = arith.addf %3, %5 : vector<8x256xf32>
    %cst_5 = arith.constant 0.000000e+00 : f32
    %7 = vector.broadcast %cst_5 : f32 to vector<8x256xf32>
    %8 = arith.maximumf %6, %7 : vector<8x256xf32>
    %9 = arith.truncf %8 : vector<8x256xf32> to vector<8x256xbf16>
    %c0_6 = arith.constant 0 : index
    %c0_7 = arith.constant 0 : index
    %10 = vector.load %arg4[%c0_6, %c0_7] : memref<256x128xbf16, #tpu.memory_space<vmem>>, vector<256x128xbf16>
    %cst_8 = arith.constant dense<0.000000e+00> : vector<8x128xf32>
    %11 = tpu.matmul %9, %10, %cst_8 {dimension_numbers = #tpu.dot_dimension_numbers<[1], [0], [0], [1], [0, 0, 1, 1], [], []>} : vector<8x256xbf16>, vector<256x128xbf16>, vector<8x128xf32> -> vector<8x128xf32>
    %c0_9 = arith.constant 0 : index
    %c0_10 = arith.constant 0 : index
    %12 = vector.load %arg5[%c0_9, %c0_10] : memref<1x128xf32, #tpu.memory_space<vmem>>, vector<1x128xf32>
    %13 = vector.broadcast %12 : vector<1x128xf32> to vector<8x128xf32>
    %14 = arith.addf %11, %13 : vector<8x128xf32>
    %cst_11 = arith.constant 0.000000e+00 : f32
    %15 = vector.broadcast %cst_11 : f32 to vector<8x128xf32>
    %16 = arith.maximumf %14, %15 : vector<8x128xf32>
    %17 = arith.truncf %16 : vector<8x128xf32> to vector<8x128xbf16>
    %c0_12 = arith.constant 0 : index
    %c0_13 = arith.constant 0 : index
    %18 = vector.load %arg6[%c0_12, %c0_13] : memref<128x128xbf16, #tpu.memory_space<vmem>>, vector<128x128xbf16>
    %cst_14 = arith.constant dense<0.000000e+00> : vector<8x128xf32>
    %19 = tpu.matmul %17, %18, %cst_14 {dimension_numbers = #tpu.dot_dimension_numbers<[1], [0], [0], [1], [0, 0, 1, 1], [], []>} : vector<8x128xbf16>, vector<128x128xbf16>, vector<8x128xf32> -> vector<8x128xf32>
    %c0_15 = arith.constant 0 : index
    %c0_16 = arith.constant 0 : index
    %20 = vector.load %arg7[%c0_15, %c0_16] : memref<1x128xf32, #tpu.memory_space<vmem>>, vector<1x128xf32>
    %21 = vector.broadcast %20 : vector<1x128xf32> to vector<8x128xf32>
    %22 = arith.addf %19, %21 : vector<8x128xf32>
    %cst_17 = arith.constant 0.000000e+00 : f32
    %23 = vector.broadcast %cst_17 : f32 to vector<8x128xf32>
    %24 = arith.maximumf %22, %23 : vector<8x128xf32>
    %25 = arith.truncf %24 : vector<8x128xf32> to vector<8x128xbf16>
    %c0_18 = arith.constant 0 : index
    %c0_19 = arith.constant 0 : index
    %26 = vector.load %arg8[%c0_18, %c0_19] : memref<128x64xbf16, #tpu.memory_space<vmem>>, vector<128x64xbf16>
    %cst_20 = arith.constant dense<0.000000e+00> : vector<8x64xf32>
    %27 = tpu.matmul %25, %26, %cst_20 {dimension_numbers = #tpu.dot_dimension_numbers<[1], [0], [0], [1], [0, 0, 1, 1], [], []>} : vector<8x128xbf16>, vector<128x64xbf16>, vector<8x64xf32> -> vector<8x64xf32>
    %c0_21 = arith.constant 0 : index
    %c0_22 = arith.constant 0 : index
    %28 = vector.load %arg9[%c0_21, %c0_22] : memref<1x64xf32, #tpu.memory_space<vmem>>, vector<1x64xf32>
    %29 = vector.broadcast %28 : vector<1x64xf32> to vector<8x64xf32>
    %30 = arith.addf %27, %29 : vector<8x64xf32>
    %cst_23 = arith.constant 0.000000e+00 : f32
    %31 = vector.broadcast %cst_23 : f32 to vector<8x64xf32>
    %32 = arith.maximumf %30, %31 : vector<8x64xf32>
    %33 = arith.truncf %32 : vector<8x64xf32> to vector<8x64xbf16>
    %c0_24 = arith.constant 0 : index
    %c0_25 = arith.constant 0 : index
    %34 = vector.load %arg10[%c0_24, %c0_25] : memref<64x128xbf16, #tpu.memory_space<vmem>>, vector<64x128xbf16>
    %cst_26 = arith.constant dense<0.000000e+00> : vector<8x128xf32>
    %35 = tpu.matmul %33, %34, %cst_26 {dimension_numbers = #tpu.dot_dimension_numbers<[1], [0], [0], [1], [0, 0, 1, 1], [], []>} : vector<8x64xbf16>, vector<64x128xbf16>, vector<8x128xf32> -> vector<8x128xf32>
    %c0_27 = arith.constant 0 : index
    %c0_28 = arith.constant 0 : index
    %36 = vector.load %arg11[%c0_27, %c0_28] : memref<1x128xf32, #tpu.memory_space<vmem>>, vector<1x128xf32>
    %37 = vector.broadcast %36 : vector<1x128xf32> to vector<8x128xf32>
    %38 = arith.addf %35, %37 : vector<8x128xf32>
    %c0_29 = arith.constant 0 : index
    %c0_30 = arith.constant 0 : index
    %39 = vector.load %arg12[%c0_29, %c0_30] : memref<8x128xf32, #tpu.memory_space<vmem>>, vector<8x128xf32>
    tpu.vector_store %arg12[%c0_29, %c0_30], %38 {strides = array<i32>} : memref<8x128xf32, #tpu.memory_space<vmem>>, vector<8x128xf32>,
    return
  }
  func.func @transform_0(%arg0: i32) -> (i32, i32) {
    %c0_i32 = arith.constant 0 : i32
    %c0_i32_0 = arith.constant 0 : i32
    return %arg0, %c0_i32 : i32, i32
  }
  func.func @transform_1(%arg0: i32) -> (i32, i32) {
    %c0_i32 = arith.constant 0 : i32
    %c0_i32_0 = arith.constant 0 : i32
    %c0_i32_1 = arith.constant 0 : i32
    return %c0_i32, %c0_i32_0 : i32, i32
  }
  func.func @transform_2(%arg0: i32) -> (i32, i32) {
    %c0_i32 = arith.constant 0 : i32
    %c0_i32_0 = arith.constant 0 : i32
    %c0_i32_1 = arith.constant 0 : i32
    return %c0_i32, %c0_i32_0 : i32, i32
  }
  func.func @transform_3(%arg0: i32) -> (i32, i32) {
    %c0_i32 = arith.constant 0 : i32
    %c0_i32_0 = arith.constant 0 : i32
    %c0_i32_1 = arith.constant 0 : i32
    return %c0_i32, %c0_i32_0 : i32, i32
  }
  func.func @transform_4(%arg0: i32) -> (i32, i32) {
    %c0_i32 = arith.constant 0 : i32
    %c0_i32_0 = arith.constant 0 : i32
    %c0_i32_1 = arith.constant 0 : i32
    return %c0_i32, %c0_i32_0 : i32, i32
  }
  func.func @transform_5(%arg0: i32) -> (i32, i32) {
    %c0_i32 = arith.constant 0 : i32
    %c0_i32_0 = arith.constant 0 : i32
    %c0_i32_1 = arith.constant 0 : i32
    return %c0_i32, %c0_i32_0 : i32, i32
  }
  func.func @transform_6(%arg0: i32) -> (i32, i32) {
    %c0_i32 = arith.constant 0 : i32
    %c0_i32_0 = arith.constant 0 : i32
    %c0_i32_1 = arith.constant 0 : i32
    return %c0_i32, %c0_i32_0 : i32, i32
  }
  func.func @transform_7(%arg0: i32) -> (i32, i32) {
    %c0_i32 = arith.constant 0 : i32
    %c0_i32_0 = arith.constant 0 : i32
    %c0_i32_1 = arith.constant 0 : i32
    return %c0_i32, %c0_i32_0 : i32, i32
  }
  func.func @transform_8(%arg0: i32) -> (i32, i32) {
    %c0_i32 = arith.constant 0 : i32
    %c0_i32_0 = arith.constant 0 : i32
    %c0_i32_1 = arith.constant 0 : i32
    return %c0_i32, %c0_i32_0 : i32, i32
  }
  func.func @transform_9(%arg0: i32) -> (i32, i32) {
    %c0_i32 = arith.constant 0 : i32
    %c0_i32_0 = arith.constant 0 : i32
    %c0_i32_1 = arith.constant 0 : i32
    return %c0_i32, %c0_i32_0 : i32, i32
  }
  func.func @transform_10(%arg0: i32) -> (i32, i32) {
    %c0_i32 = arith.constant 0 : i32
    %c0_i32_0 = arith.constant 0 : i32
    %c0_i32_1 = arith.constant 0 : i32
    return %c0_i32, %c0_i32_0 : i32, i32
  }
  func.func @transform_11(%arg0: i32) -> (i32, i32) {
    %c0_i32 = arith.constant 0 : i32
    %c0_i32_0 = arith.constant 0 : i32
    return %arg0, %c0_i32 : i32, i32
  }
}

</mosaic_0001>

<llo_original>
// kernel: tpu_custom_call.1
$region0: #{tpu_custom_call.1}
  #allocation0 [shape = 'u32[]', space=smem, size = 0x4, offset = 0x4, fixed_abs, tag = 'smem constant byte address 0x4 - core index']
  #allocation1 [shape = 'u32[72,128]{1,0:T(1,128)}', space=vmem, size = 0x9000, scoped, tag = 'internal scratch']
  %s0 = inlined_call_operand.hbm [shape: f32[8,784], index: 0, kind: input, shape index: {}]
  %s1 = inlined_call_operand.hbm [shape: bf16[784,256], index: 1, kind: input, shape index: {}]
  %s2 = inlined_call_operand.vmem [shape: f32[1,256], index: 2, kind: input, shape index: {}]
  %s3 = inlined_call_operand.hbm [shape: bf16[256,128], index: 3, kind: input, shape index: {}]
  %s4 = inlined_call_operand.vmem [shape: f32[1,128], index: 4, kind: input, shape index: {}]
  %s5 = inlined_call_operand.vmem [shape: bf16[128,128], index: 5, kind: input, shape index: {}]
  %s6 = inlined_call_operand.vmem [shape: f32[1,128], index: 6, kind: input, shape index: {}]
  %s7 = inlined_call_operand.vmem [shape: bf16[128,64], index: 7, kind: input, shape index: {}]
  %s8 = inlined_call_operand.vmem [shape: f32[1,64], index: 8, kind: input, shape index: {}]
  %s9 = inlined_call_operand.vmem [shape: bf16[64,128], index: 9, kind: input, shape index: {}]
  %s10 = inlined_call_operand.vmem [shape: f32[1,128], index: 10, kind: input, shape index: {}]
  %s11 = inlined_call_operand.hbm [shape: f32[8,128], index: 11, kind: output, shape index: {}]
  %s12 = sld [smem:[#allocation0]]
  $region66: #{tpu_custom_call.1} parent=0
    _
  %s14 = ssub.s32 1, %s12
  %s15 = scalar_select 0, %s14, %s12
  $region1: #{tpu_custom_call.1} parent=0
    #allocation2 [shape = 'u8[28672]{0}', space=vmem, size = 0x7000, scoped, tag = 'input window, operand 0, single buffered']
    #allocation3 [shape = 's32[1]{0}', space=sflag, size = 0x4, scoped, tag = 'scoped memory for tpu_custom_call.1']
    #allocation4 [shape = 's32[1]{0}', space=sflag, size = 0x4, scoped, tag = 'scoped memory for tpu_custom_call.1']
    #allocation5 [shape = 'u8[401408]{0}', space=vmem, size = 0x62000, scoped, tag = 'input window, operand 1, single buffered']
    #allocation6 [shape = 's32[1]{0}', space=sflag, size = 0x4, scoped, tag = 'scoped memory for tpu_custom_call.1']
    #allocation7 [shape = 'u8[65536]{0}', space=vmem, size = 0x10000, scoped, tag = 'input window, operand 3, single buffered']
    #allocation8 [shape = 'u8[4096]{0}', space=vmem, size = 0x1000, scoped, tag = 'output window, operand 0, single buffered']
    %16 = vsyncpa [#allocation3], 0
    %17 = vsyncpa [#allocation6], 0
    %18 = vsyncpa [#allocation4], 0
    // Predicated region
    $region2: #{tpu_custom_call.1} parent=1 // pred_check
      _
    $region3: #{tpu_custom_call.1} parent=1 // pred_check_branch
      %20 = sbr.rel (0) target = $region5
    $region4: #{tpu_custom_call.1} parent=1 // pred_region
      %22 = vsyncadd [#allocation3], 0
      %s24 = sshll.u32 %s0, 4
      %s25 = int_to_ptr.hbm [resolvable:$true] %s24
      %s26 = sshll.u32 [#allocation2], 4
      %s27 = int_to_ptr.vmem [resolvable:$true] %s26
      %29 = dma.hbm_to_vmem [thread:$0]  %s25, 896, %s27, [#allocation3]
    $region5: #{tpu_custom_call.1} parent=1 // pred_fallthru
      _
    // Predicated region
    $region6: #{tpu_custom_call.1} parent=1 // pred_check
      _
    $region7: #{tpu_custom_call.1} parent=1 // pred_check_branch
      %31 = sbr.rel (0) target = $region9
    $region8: #{tpu_custom_call.1} parent=1 // pred_region
      %33 = vsyncadd [#allocation6], 0
      %s34 = sshll.u32 %s1, 4
      %s35 = int_to_ptr.hbm [resolvable:$true] %s34
      %s36 = sshll.u32 [#allocation5], 4
      %s37 = int_to_ptr.vmem [resolvable:$true] %s36
      %42 = dma.hbm_to_vmem [thread:$0]  %s35, 12544, %s37, [#allocation6], 128, 128, 8
    $region9: #{tpu_custom_call.1} parent=1 // pred_fallthru
      _
    // Predicated region
    $region10: #{tpu_custom_call.1} parent=1 // pred_check
      _
    $region11: #{tpu_custom_call.1} parent=1 // pred_check_branch
      %44 = sbr.rel (0) target = $region13
    $region12: #{tpu_custom_call.1} parent=1 // pred_region
      _
    $region13: #{tpu_custom_call.1} parent=1 // pred_fallthru
      _
    // Predicated region
    $region14: #{tpu_custom_call.1} parent=1 // pred_check
      _
    $region15: #{tpu_custom_call.1} parent=1 // pred_check_branch
      %46 = sbr.rel (0) target = $region17
    $region16: #{tpu_custom_call.1} parent=1 // pred_region
      %48 = vsyncadd [#allocation6], 0
      %s49 = sshll.u32 %s3, 4
      %s50 = int_to_ptr.hbm [resolvable:$true] %s49
      %s51 = sshll.u32 [#allocation7], 4
      %s52 = int_to_ptr.vmem [resolvable:$true] %s51
      %57 = dma.hbm_to_vmem [thread:$0]  %s50, 2048, %s52, [#allocation6], 64, 64, 4
    $region17: #{tpu_custom_call.1} parent=1 // pred_fallthru
      _
    // Predicated region
    $region18: #{tpu_custom_call.1} parent=1 // pred_check
      _
    $region19: #{tpu_custom_call.1} parent=1 // pred_check_branch
      %59 = sbr.rel (0) target = $region21
    $region20: #{tpu_custom_call.1} parent=1 // pred_region
      _
    $region21: #{tpu_custom_call.1} parent=1 // pred_fallthru
      _
    // Predicated region
    $region22: #{tpu_custom_call.1} parent=1 // pred_check
      _
    $region23: #{tpu_custom_call.1} parent=1 // pred_check_branch
      %61 = sbr.rel (0) target = $region25
    $region24: #{tpu_custom_call.1} parent=1 // pred_region
      _
    $region25: #{tpu_custom_call.1} parent=1 // pred_fallthru
      _
    // Predicated region
    $region26: #{tpu_custom_call.1} parent=1 // pred_check
      _
    $region27: #{tpu_custom_call.1} parent=1 // pred_check_branch
      %63 = sbr.rel (0) target = $region29
    $region28: #{tpu_custom_call.1} parent=1 // pred_region
      _
    $region29: #{tpu_custom_call.1} parent=1 // pred_fallthru
      _
    // Predicated region
    $region30: #{tpu_custom_call.1} parent=1 // pred_check
      _
    $region31: #{tpu_custom_call.1} parent=1 // pred_check_branch
      %65 = sbr.rel (0) target = $region33
    $region32: #{tpu_custom_call.1} parent=1 // pred_region
      _
    $region33: #{tpu_custom_call.1} parent=1 // pred_fallthru
      _
    // Predicated region
    $region34: #{tpu_custom_call.1} parent=1 // pred_check
      _
    $region35: #{tpu_custom_call.1} parent=1 // pred_check_branch
      %67 = sbr.rel (0) target = $region37
    $region36: #{tpu_custom_call.1} parent=1 // pred_region
      _
    $region37: #{tpu_custom_call.1} parent=1 // pred_fallthru
      _
    // Predicated region
    $region38: #{tpu_custom_call.1} parent=1 // pred_check
      _
    $region39: #{tpu_custom_call.1} parent=1 // pred_check_branch
      %69 = sbr.rel (0) target = $region41
    $region40: #{tpu_custom_call.1} parent=1 // pred_region
      _
    $region41: #{tpu_custom_call.1} parent=1 // pred_fallthru
      _
    // Predicated region
    $region42: #{tpu_custom_call.1} parent=1 // pred_check
      _
    $region43: #{tpu_custom_call.1} parent=1 // pred_check_branch
      %71 = sbr.rel (0) target = $region45
    $region44: #{tpu_custom_call.1} parent=1 // pred_region
      _
    $region45: #{tpu_custom_call.1} parent=1 // pred_fallthru
      _
    // Predicated region
    $region46: #{tpu_custom_call.1} parent=1 // pred_check
      _
    $region47: #{tpu_custom_call.1} parent=1 // pred_check_branch
      %73 = sbr.rel (0) target = $region49
    $region48: #{tpu_custom_call.1} parent=1 // pred_region
      %75 = dma.done [#allocation3], 896
    $region49: #{tpu_custom_call.1} parent=1 // pred_fallthru
      _
    // Predicated region
    $region50: #{tpu_custom_call.1} parent=1 // pred_check
      _
    $region51: #{tpu_custom_call.1} parent=1 // pred_check_branch
      %77 = sbr.rel (0) target = $region53
    $region52: #{tpu_custom_call.1} parent=1 // pred_region
      %79 = dma.done [#allocation6], 12544
    $region53: #{tpu_custom_call.1} parent=1 // pred_fallthru
      _
    // Predicated region
    $region54: #{tpu_custom_call.1} parent=1 // pred_check
      _
    $region55: #{tpu_custom_call.1} parent=1 // pred_check_branch
      %81 = sbr.rel (0) target = $region57
    $region56: #{tpu_custom_call.1} parent=1 // pred_region
      %83 = dma.done [#allocation6], 2048
    $region57: #{tpu_custom_call.1} parent=1 // pred_fallthru
      _
    %v85 = vld [vmem:[#allocation2] sm:$0xff]
    %v86 = vld [vmem:[#allocation2 + $0x8] sm:$0xff]
    %v87 = vld [vmem:[#allocation2 + $0x10] sm:$0xff]
    %v88 = vld [vmem:[#allocation2 + $0x18] sm:$0xff]
    %v89 = vld [vmem:[#allocation2 + $0x20] sm:$0xff]
    %v90 = vld [vmem:[#allocation2 + $0x28] sm:$0xff]
    %v91 = vld [vmem:[#allocation2 + $0x30] sm:$0xff]
    %v92 = vpack.c.bf16 %v85, %v85
    %v93 = vpack.c.bf16 %v86, %v86
    %v94 = vpack.c.bf16 %v87, %v87
    %v95 = vpack.c.bf16 %v88, %v88
    %v96 = vpack.c.bf16 %v89, %v89
    %v97 = vpack.c.bf16 %v90, %v90
    %v98 = vpack.c.bf16 %v91, %v91
    %v99 = vld [vmem:[#allocation5] sm:$0xff]
    %v100 = vld [vmem:[#allocation5 + $0x8] sm:$0xff]
    %v101 = vld [vmem:[#allocation5 + $0x10] sm:$0xff]
    %v102 = vld [vmem:[#allocation5 + $0x18] sm:$0xff]
    %v103 = vld [vmem:[#allocation5 + $0x20] sm:$0xff]
    %v104 = vld [vmem:[#allocation5 + $0x28] sm:$0xff]
    %v105 = vld [vmem:[#allocation5 + $0x30] sm:$0xff]
    %v106 = vld [vmem:[#allocation5 + $0x38] sm:$0xff]
    %v107 = vld [vmem:[#allocation5 + $0x40] sm:$0xff]
    %v108 = vld [vmem:[#allocation5 + $0x48] sm:$0xff]
    %v109 = vld [vmem:[#allocation5 + $0x50] sm:$0xff]
    %v110 = vld [vmem:[#allocation5 + $0x58] sm:$0xff]
    %v111 = vld [vmem:[#allocation5 + $0x60] sm:$0xff]
    %v112 = vld [vmem:[#allocation5 + $0x68] sm:$0xff]
    %v113 = vld [vmem:[#allocation5 + $0x70] sm:$0xff]
    %v114 = vld [vmem:[#allocation5 + $0x78] sm:$0xff]
    %v115 = vld [vmem:[#allocation5 + $0x80] sm:$0xff]
    %v116 = vld [vmem:[#allocation5 + $0x88] sm:$0xff]
    %v117 = vld [vmem:[#allocation5 + $0x90] sm:$0xff]
    %v118 = vld [vmem:[#allocation5 + $0x98] sm:$0xff]
    %v119 = vld [vmem:[#allocation5 + $0xa0] sm:$0xff]
    %v120 = vld [vmem:[#allocation5 + $0xa8] sm:$0xff]
    %v121 = vld [vmem:[#allocation5 + $0xb0] sm:$0xff]
    %v122 = vld [vmem:[#allocation5 + $0xb8] sm:$0xff]
    %v123 = vld [vmem:[#allocation5 + $0xc0] sm:$0xff]
    %v124 = vld [vmem:[#allocation5 + $0xc8] sm:$0xff]
    %v125 = vld [vmem:[#allocation5 + $0xd0] sm:$0xff]
    %v126 = vld [vmem:[#allocation5 + $0xd8] sm:$0xff]
    %v127 = vld [vmem:[#allocation5 + $0xe0] sm:$0xff]
    %v128 = vld [vmem:[#allocation5 + $0xe8] sm:$0xff]
    %v129 = vld [vmem:[#allocation5 + $0xf0] sm:$0xff]
    %v130 = vld [vmem:[#allocation5 + $0xf8] sm:$0xff]
    %v131 = vld [vmem:[#allocation5 + $0x100] sm:$0xff]
    %v132 = vld [vmem:[#allocation5 + $0x108] sm:$0xff]
    %v133 = vld [vmem:[#allocation5 + $0x110] sm:$0xff]
    %v134 = vld [vmem:[#allocation5 + $0x118] sm:$0xff]
    %v135 = vld [vmem:[#allocation5 + $0x120] sm:$0xff]
    %v136 = vld [vmem:[#allocation5 + $0x128] sm:$0xff]
    %v137 = vld [vmem:[#allocation5 + $0x130] sm:$0xff]
    %v138 = vld [vmem:[#allocation5 + $0x138] sm:$0xff]
    %v139 = vld [vmem:[#allocation5 + $0x140] sm:$0xff]
    %v140 = vld [vmem:[#allocation5 + $0x148] sm:$0xff]
    %v141 = vld [vmem:[#allocation5 + $0x150] sm:$0xff]
    %v142 = vld [vmem:[#allocation5 + $0x158] sm:$0xff]
    %v143 = vld [vmem:[#allocation5 + $0x160] sm:$0xff]
    %v144 = vld [vmem:[#allocation5 + $0x168] sm:$0xff]
    %v145 = vld [vmem:[#allocation5 + $0x170] sm:$0xff]
    %v146 = vld [vmem:[#allocation5 + $0x178] sm:$0xff]
    %v147 = vld [vmem:[#allocation5 + $0x180] sm:$0xff]
    %v148 = vld [vmem:[#allocation5 + $0x188] sm:$0xff]
    %v149 = vld [vmem:[#allocation5 + $0x190] sm:$0xff]
    %v150 = vld [vmem:[#allocation5 + $0x198] sm:$0xff]
    %v151 = vld [vmem:[#allocation5 + $0x1a0] sm:$0xff]
    %v152 = vld [vmem:[#allocation5 + $0x1a8] sm:$0xff]
    %v153 = vld [vmem:[#allocation5 + $0x1b0] sm:$0xff]
    %v154 = vld [vmem:[#allocation5 + $0x1b8] sm:$0xff]
    %v155 = vld [vmem:[#allocation5 + $0x1c0] sm:$0xff]
    %v156 = vld [vmem:[#allocation5 + $0x1c8] sm:$0xff]
    %v157 = vld [vmem:[#allocation5 + $0x1d0] sm:$0xff]
    %v158 = vld [vmem:[#allocation5 + $0x1d8] sm:$0xff]
    %v159 = vld [vmem:[#allocation5 + $0x1e0] sm:$0xff]
    %v160 = vld [vmem:[#allocation5 + $0x1e8] sm:$0xff]
    %v161 = vld [vmem:[#allocation5 + $0x1f0] sm:$0xff]
    %v162 = vld [vmem:[#allocation5 + $0x1f8] sm:$0xff]
    %v163 = vld [vmem:[#allocation5 + $0x200] sm:$0xff]
    %v164 = vld [vmem:[#allocation5 + $0x208] sm:$0xff]
    %v165 = vld [vmem:[#allocation5 + $0x210] sm:$0xff]
    %v166 = vld [vmem:[#allocation5 + $0x218] sm:$0xff]
    %v167 = vld [vmem:[#allocation5 + $0x220] sm:$0xff]
    %v168 = vld [vmem:[#allocation5 + $0x228] sm:$0xff]
    %v169 = vld [vmem:[#allocation5 + $0x230] sm:$0xff]
    %v170 = vld [vmem:[#allocation5 + $0x238] sm:$0xff]
    %v171 = vld [vmem:[#allocation5 + $0x240] sm:$0xff]
    %v172 = vld [vmem:[#allocation5 + $0x248] sm:$0xff]
    %v173 = vld [vmem:[#allocation5 + $0x250] sm:$0xff]
    %v174 = vld [vmem:[#allocation5 + $0x258] sm:$0xff]
    %v175 = vld [vmem:[#allocation5 + $0x260] sm:$0xff]
    %v176 = vld [vmem:[#allocation5 + $0x268] sm:$0xff]
    %v177 = vld [vmem:[#allocation5 + $0x270] sm:$0xff]
    %v178 = vld [vmem:[#allocation5 + $0x278] sm:$0xff]
    %v179 = vld [vmem:[#allocation5 + $0x280] sm:$0xff]
    %v180 = vld [vmem:[#allocation5 + $0x288] sm:$0xff]
    %v181 = vld [vmem:[#allocation5 + $0x290] sm:$0xff]
    %v182 = vld [vmem:[#allocation5 + $0x298] sm:$0xff]
    %v183 = vld [vmem:[#allocation5 + $0x2a0] sm:$0xff]
    %v184 = vld [vmem:[#allocation5 + $0x2a8] sm:$0xff]
    %v185 = vld [vmem:[#allocation5 + $0x2b0] sm:$0xff]
    %v186 = vld [vmem:[#allocation5 + $0x2b8] sm:$0xff]
    %v187 = vld [vmem:[#allocation5 + $0x2c0] sm:$0xff]
    %v188 = vld [vmem:[#allocation5 + $0x2c8] sm:$0xff]
    %v189 = vld [vmem:[#allocation5 + $0x2d0] sm:$0xff]
    %v190 = vld [vmem:[#allocation5 + $0x2d8] sm:$0xff]
    %v191 = vld [vmem:[#allocation5 + $0x2e0] sm:$0xff]
    %v192 = vld [vmem:[#allocation5 + $0x2e8] sm:$0xff]
    %v193 = vld [vmem:[#allocation5 + $0x2f0] sm:$0xff]
    %v194 = vld [vmem:[#allocation5 + $0x2f8] sm:$0xff]
    %v195 = vld [vmem:[#allocation5 + $0x300] sm:$0xff]
    %v196 = vld [vmem:[#allocation5 + $0x308] sm:$0xff]
    %v197 = vld [vmem:[%s2] sm:$0x3]
    %v199 = vperm.slane %v197, 0
    %v200 = vperm.slane %v197, 1
    %v301 = vunpack.c.l.b16 %v99
    %v302 = vunpack.c.h.b16 %v99
    %v303 = vunpack.c.l.b16 %v100
    %v304 = vunpack.c.h.b16 %v100
    %v305 = vunpack.c.l.b16 %v101
    %v306 = vunpack.c.h.b16 %v101
    %v307 = vunpack.c.l.b16 %v102
    %v308 = vunpack.c.h.b16 %v102
    %v309 = vunpack.c.l.b16 %v103
    %v310 = vunpack.c.h.b16 %v103
    %v311 = vunpack.c.l.b16 %v104
    %v312 = vunpack.c.h.b16 %v104
    %v313 = vunpack.c.l.b16 %v105
    %v314 = vunpack.c.h.b16 %v105
    %v315 = vunpack.c.l.b16 %v106
    %v316 = vunpack.c.h.b16 %v106
    %v317 = vunpack.c.l.b16 %v107
    %v318 = vunpack.c.h.b16 %v107
    %v319 = vunpack.c.l.b16 %v108
    %v320 = vunpack.c.h.b16 %v108
    %v321 = vunpack.c.l.b16 %v109
    %v322 = vunpack.c.h.b16 %v109
    %v323 = vunpack.c.l.b16 %v110
    %v324 = vunpack.c.h.b16 %v110
    %v325 = vunpack.c.l.b16 %v111
    %v326 = vunpack.c.h.b16 %v111
    %v327 = vunpack.c.l.b16 %v112
    %v328 = vunpack.c.h.b16 %v112
    %v329 = vunpack.c.l.b16 %v113
    %v330 = vunpack.c.h.b16 %v113
    %v331 = vunpack.c.l.b16 %v114
    %v332 = vunpack.c.h.b16 %v114
    %v333 = vunpack.c.l.b16 %v115
    %v334 = vunpack.c.h.b16 %v115
    %v335 = vunpack.c.l.b16 %v116
    %v336 = vunpack.c.h.b16 %v116
    %v337 = vunpack.c.l.b16 %v117
    %v338 = vunpack.c.h.b16 %v117
    %v339 = vunpack.c.l.b16 %v118
    %v340 = vunpack.c.h.b16 %v118
    %v341 = vunpack.c.l.b16 %v119
    %v342 = vunpack.c.h.b16 %v119
    %v343 = vunpack.c.l.b16 %v120
    %v344 = vunpack.c.h.b16 %v120
    %v345 = vunpack.c.l.b16 %v121
    %v346 = vunpack.c.h.b16 %v121
    %v347 = vunpack.c.l.b16 %v122
    %v348 = vunpack.c.h.b16 %v122
    %v349 = vunpack.c.l.b16 %v123
    %v350 = vunpack.c.h.b16 %v123
    %v351 = vunpack.c.l.b16 %v124
    %v352 = vunpack.c.h.b16 %v124
    %v353 = vunpack.c.l.b16 %v125
    %v354 = vunpack.c.h.b16 %v125
    %v355 = vunpack.c.l.b16 %v126
    %v356 = vunpack.c.h.b16 %v126
    %v357 = vunpack.c.l.b16 %v127
    %v358 = vunpack.c.h.b16 %v127
    %v359 = vunpack.c.l.b16 %v128
    %v360 = vunpack.c.h.b16 %v128
    %v361 = vunpack.c.l.b16 %v129
    %v362 = vunpack.c.h.b16 %v129
    %v363 = vunpack.c.l.b16 %v130
    %v364 = vunpack.c.h.b16 %v130
    %v365 = vunpack.c.l.b16 %v131
    %v366 = vunpack.c.h.b16 %v131
    %v367 = vunpack.c.l.b16 %v132
    %v368 = vunpack.c.h.b16 %v132
    %v369 = vunpack.c.l.b16 %v133
    %v370 = vunpack.c.h.b16 %v133
    %v371 = vunpack.c.l.b16 %v134
    %v372 = vunpack.c.h.b16 %v134
    %v373 = vunpack.c.l.b16 %v135
    %v374 = vunpack.c.h.b16 %v135
    %v375 = vunpack.c.l.b16 %v136
    %v376 = vunpack.c.h.b16 %v136
    %v377 = vunpack.c.l.b16 %v137
    %v378 = vunpack.c.h.b16 %v137
    %v379 = vunpack.c.l.b16 %v138
    %v380 = vunpack.c.h.b16 %v138
    %v381 = vunpack.c.l.b16 %v139
    %v382 = vunpack.c.h.b16 %v139
    %v383 = vunpack.c.l.b16 %v140
    %v384 = vunpack.c.h.b16 %v140
    %v385 = vunpack.c.l.b16 %v141
    %v386 = vunpack.c.h.b16 %v141
    %v387 = vunpack.c.l.b16 %v142
    %v388 = vunpack.c.h.b16 %v142
    %v389 = vunpack.c.l.b16 %v143
    %v390 = vunpack.c.h.b16 %v143
    %v391 = vunpack.c.l.b16 %v144
    %v392 = vunpack.c.h.b16 %v144
    %v393 = vunpack.c.l.b16 %v145
    %v394 = vunpack.c.h.b16 %v145
    %v395 = vunpack.c.l.b16 %v146
    %v396 = vunpack.c.h.b16 %v146
    %v397 = vunpack.c.l.b16 %v147
    %v398 = vunpack.c.h.b16 %v147
    %v399 = vunpack.c.l.b16 %v148
    %v400 = vunpack.c.h.b16 %v148
    %v401 = vunpack.c.l.b16 %v149
    %v402 = vunpack.c.h.b16 %v149
    %v403 = vunpack.c.l.b16 %v150
    %v404 = vunpack.c.h.b16 %v150
    %v405 = vunpack.c.l.b16 %v151
    %v406 = vunpack.c.h.b16 %v151
    %v407 = vunpack.c.l.b16 %v152
    %v408 = vunpack.c.h.b16 %v152
    %v409 = vunpack.c.l.b16 %v153
    %v410 = vunpack.c.h.b16 %v153
    %v411 = vunpack.c.l.b16 %v154
    %v412 = vunpack.c.h.b16 %v154
    %v413 = vunpack.c.l.b16 %v155
    %v414 = vunpack.c.h.b16 %v155
    %v415 = vunpack.c.l.b16 %v156
    %v416 = vunpack.c.h.b16 %v156
    %v417 = vunpack.c.l.b16 %v157
    %v418 = vunpack.c.h.b16 %v157
    %v419 = vunpack.c.l.b16 %v158
    %v420 = vunpack.c.h.b16 %v158
    %v421 = vunpack.c.l.b16 %v159
    %v422 = vunpack.c.h.b16 %v159
    %v423 = vunpack.c.l.b16 %v160
    %v424 = vunpack.c.h.b16 %v160
    %v425 = vunpack.c.l.b16 %v161
    %v426 = vunpack.c.h.b16 %v161
    %v427 = vunpack.c.l.b16 %v162
    %v428 = vunpack.c.h.b16 %v162
    %v429 = vunpack.c.l.b16 %v163
    %v430 = vunpack.c.h.b16 %v163
    %v431 = vunpack.c.l.b16 %v164
    %v432 = vunpack.c.h.b16 %v164
    %v433 = vunpack.c.l.b16 %v165
    %v434 = vunpack.c.h.b16 %v165
    %v435 = vunpack.c.l.b16 %v166
    %v436 = vunpack.c.h.b16 %v166
    %v437 = vunpack.c.l.b16 %v167
    %v438 = vunpack.c.h.b16 %v167
    %v439 = vunpack.c.l.b16 %v168
    %v440 = vunpack.c.h.b16 %v168
    %v441 = vunpack.c.l.b16 %v169
    %v442 = vunpack.c.h.b16 %v169
    %v443 = vunpack.c.l.b16 %v170
    %v444 = vunpack.c.h.b16 %v170
    %v445 = vunpack.c.l.b16 %v171
    %v446 = vunpack.c.h.b16 %v171
    %v447 = vunpack.c.l.b16 %v172
    %v448 = vunpack.c.h.b16 %v172
    %v449 = vunpack.c.l.b16 %v173
    %v450 = vunpack.c.h.b16 %v173
    %v451 = vunpack.c.l.b16 %v174
    %v452 = vunpack.c.h.b16 %v174
    %v453 = vunpack.c.l.b16 %v175
    %v454 = vunpack.c.h.b16 %v175
    %v455 = vunpack.c.l.b16 %v176
    %v456 = vunpack.c.h.b16 %v176
    %v457 = vunpack.c.l.b16 %v177
    %v458 = vunpack.c.h.b16 %v177
    %v459 = vunpack.c.l.b16 %v178
    %v460 = vunpack.c.h.b16 %v178
    %v461 = vunpack.c.l.b16 %v179
    %v462 = vunpack.c.h.b16 %v179
    %v463 = vunpack.c.l.b16 %v180
    %v464 = vunpack.c.h.b16 %v180
    %v465 = vunpack.c.l.b16 %v181
    %v466 = vunpack.c.h.b16 %v181
    %v467 = vunpack.c.l.b16 %v182
    %v468 = vunpack.c.h.b16 %v182
    %v469 = vunpack.c.l.b16 %v183
    %v470 = vunpack.c.h.b16 %v183
    %v471 = vunpack.c.l.b16 %v184
    %v472 = vunpack.c.h.b16 %v184
    %v473 = vunpack.c.l.b16 %v185
    %v474 = vunpack.c.h.b16 %v185
    %v475 = vunpack.c.l.b16 %v186
    %v476 = vunpack.c.h.b16 %v186
    %v477 = vunpack.c.l.b16 %v187
    %v478 = vunpack.c.h.b16 %v187
    %v479 = vunpack.c.l.b16 %v188
    %v480 = vunpack.c.h.b16 %v188
    %v481 = vunpack.c.l.b16 %v189
    %v482 = vunpack.c.h.b16 %v189
    %v483 = vunpack.c.l.b16 %v190
    %v484 = vunpack.c.h.b16 %v190
    %v485 = vunpack.c.l.b16 %v191
    %v486 = vunpack.c.h.b16 %v191
    %v487 = vunpack.c.l.b16 %v192
    %v488 = vunpack.c.h.b16 %v192
    %v489 = vunpack.c.l.b16 %v193
    %v490 = vunpack.c.h.b16 %v193
    %v491 = vunpack.c.l.b16 %v194
    %v492 = vunpack.c.h.b16 %v194
    %v493 = vunpack.c.l.b16 %v195
    %v494 = vunpack.c.h.b16 %v195
    %v495 = vunpack.c.l.b16 %v196
    %v496 = vunpack.c.h.b16 %v196
    %v497 = vpack.c.b16 %v303, %v301
    %v498 = vpack.c.b16 %v304, %v302
    %v499 = vpack.c.b16 %v307, %v305
    %v500 = vpack.c.b16 %v308, %v306
    %v501 = vpack.c.b16 %v311, %v309
    %v502 = vpack.c.b16 %v312, %v310
    %v503 = vpack.c.b16 %v315, %v313
    %v504 = vpack.c.b16 %v316, %v314
    %v505 = vpack.c.b16 %v319, %v317
    %v506 = vpack.c.b16 %v320, %v318
    %v507 = vpack.c.b16 %v323, %v321
    %v508 = vpack.c.b16 %v324, %v322
    %v509 = vpack.c.b16 %v327, %v325
    %v510 = vpack.c.b16 %v328, %v326
    %v511 = vpack.c.b16 %v331, %v329
    %v512 = vpack.c.b16 %v332, %v330
    %v513 = vpack.c.b16 %v335, %v333
    %v514 = vpack.c.b16 %v336, %v334
    %v515 = vpack.c.b16 %v339, %v337
    %v516 = vpack.c.b16 %v340, %v338
    %v517 = vpack.c.b16 %v343, %v341
    %v518 = vpack.c.b16 %v344, %v342
    %v519 = vpack.c.b16 %v347, %v345
    %v520 = vpack.c.b16 %v348, %v346
    %v521 = vpack.c.b16 %v351, %v349
    %v522 = vpack.c.b16 %v352, %v350
    %v523 = vpack.c.b16 %v355, %v353
    %v524 = vpack.c.b16 %v356, %v354
    %v525 = vpack.c.b16 %v359, %v357
    %v526 = vpack.c.b16 %v360, %v358
    %v527 = vpack.c.b16 %v363, %v361
    %v528 = vpack.c.b16 %v364, %v362
    %v529 = vpack.c.b16 %v367, %v365
    %v530 = vpack.c.b16 %v368, %v366
    %v531 = vpack.c.b16 %v371, %v369
    %v532 = vpack.c.b16 %v372, %v370
    %v533 = vpack.c.b16 %v375, %v373
    %v534 = vpack.c.b16 %v376, %v374
    %v535 = vpack.c.b16 %v379, %v377
    %v536 = vpack.c.b16 %v380, %v378
    %v537 = vpack.c.b16 %v383, %v381
    %v538 = vpack.c.b16 %v384, %v382
    %v539 = vpack.c.b16 %v387, %v385
    %v540 = vpack.c.b16 %v388, %v386
    %v541 = vpack.c.b16 %v391, %v389
    %v542 = vpack.c.b16 %v392, %v390
    %v543 = vpack.c.b16 %v395, %v393
    %v544 = vpack.c.b16 %v396, %v394
    %v545 = vpack.c.b16 %v399, %v397
    %v546 = vpack.c.b16 %v400, %v398
    %v547 = vpack.c.b16 %v403, %v401
    %v548 = vpack.c.b16 %v404, %v402
    %v549 = vpack.c.b16 %v407, %v405
    %v550 = vpack.c.b16 %v408, %v406
    %v551 = vpack.c.b16 %v411, %v409
    %v552 = vpack.c.b16 %v412, %v410
    %v553 = vpack.c.b16 %v415, %v413
    %v554 = vpack.c.b16 %v416, %v414
    %v555 = vpack.c.b16 %v419, %v417
    %v556 = vpack.c.b16 %v420, %v418
    %v557 = vpack.c.b16 %v423, %v421
    %v558 = vpack.c.b16 %v424, %v422
    %v559 = vpack.c.b16 %v427, %v425
    %v560 = vpack.c.b16 %v428, %v426
    %v561 = vpack.c.b16 %v431, %v429
    %v562 = vpack.c.b16 %v432, %v430
    %v563 = vpack.c.b16 %v435, %v433
    %v564 = vpack.c.b16 %v436, %v434
    %v565 = vpack.c.b16 %v439, %v437
    %v566 = vpack.c.b16 %v440, %v438
    %v567 = vpack.c.b16 %v443, %v441
    %v568 = vpack.c.b16 %v444, %v442
    %v569 = vpack.c.b16 %v447, %v445
    %v570 = vpack.c.b16 %v448, %v446
    %v571 = vpack.c.b16 %v451, %v449
    %v572 = vpack.c.b16 %v452, %v450
    %v573 = vpack.c.b16 %v455, %v453
    %v574 = vpack.c.b16 %v456, %v454
    %v575 = vpack.c.b16 %v459, %v457
    %v576 = vpack.c.b16 %v460, %v458
    %v577 = vpack.c.b16 %v463, %v461
    %v578 = vpack.c.b16 %v464, %v462
    %v579 = vpack.c.b16 %v467, %v465
    %v580 = vpack.c.b16 %v468, %v466
    %v581 = vpack.c.b16 %v471, %v469
    %v582 = vpack.c.b16 %v472, %v470
    %v583 = vpack.c.b16 %v475, %v473
    %v584 = vpack.c.b16 %v476, %v474
    %v585 = vpack.c.b16 %v479, %v477
    %v586 = vpack.c.b16 %v480, %v478
    %v587 = vpack.c.b16 %v483, %v481
    %v588 = vpack.c.b16 %v484, %v482
    %v589 = vpack.c.b16 %v487, %v485
    %v590 = vpack.c.b16 %v488, %v486
    %v591 = vpack.c.b16 %v491, %v489
    %v592 = vpack.c.b16 %v492, %v490
    %v593 = vpack.c.b16 %v495, %v493
    %v594 = vpack.c.b16 %v496, %v494
    %vm693 = vcmask 130048
    %v695 = vsel %vm693, %v98, 0
    %697 = vmatpush.bf16.msra.mxu0 %v511
    %698 = vmatpush.bf16.msra.mxu0 %v509
    %699 = vmatpush.bf16.msra.mxu0 %v507
    %700 = vmatpush.bf16.msra.mxu0 %v505
    %701 = vmatpush.bf16.msra.mxu0 %v503
    %702 = vmatpush.bf16.msra.mxu0 %v501
    %703 = vmatpush.bf16.msra.mxu0 %v499
    %704 = vmatpush.bf16.msra.mxu0 %v497
    %705 = vmatmul.bf16.gmra.mxu0 %v92
    %v706 = vpop.f32.mrf.mxu0
    %v707 = vadd.f32 %v199, %v706
    %v708 = vpop.f32.mrf.mxu0
    %709 = vdwg.mxu0
    %710 = vmatpush.bf16.msra.mxu0 %v527
    %711 = vmatpush.bf16.msra.mxu0 %v525
    %712 = vmatpush.bf16.msra.mxu0 %v523
    %713 = vmatpush.bf16.msra.mxu0 %v521
    %714 = vmatpush.bf16.msra.mxu0 %v519
    %715 = vmatpush.bf16.msra.mxu0 %v517
    %716 = vmatpush.bf16.msra.mxu0 %v515
    %717 = vmatpush.bf16.msra.mxu0 %v513
    %718 = vmatmul.bf16.gmra.mxu0 %v93
    %v719 = vpop.f32.mrf.mxu0
    %v720 = vadd.f32 %v707, %v719
    %v721 = vpop.f32.mrf.mxu0
    %722 = vdwg.mxu0
    %723 = vmatpush.bf16.msra.mxu0 %v543
    %724 = vmatpush.bf16.msra.mxu0 %v541
    %725 = vmatpush.bf16.msra.mxu0 %v539
    %726 = vmatpush.bf16.msra.mxu0 %v537
    %727 = vmatpush.bf16.msra.mxu0 %v535
    %728 = vmatpush.bf16.msra.mxu0 %v533
    %729 = vmatpush.bf16.msra.mxu0 %v531
    %730 = vmatpush.bf16.msra.mxu0 %v529
    %731 = vmatmul.bf16.gmra.mxu0 %v94
    %v732 = vpop.f32.mrf.mxu0
    %v733 = vadd.f32 %v720, %v732
    %v734 = vpop.f32.mrf.mxu0
    %735 = vdwg.mxu0
    %736 = vmatpush.bf16.msra.mxu0 %v559
    %737 = vmatpush.bf16.msra.mxu0 %v557
    %738 = vmatpush.bf16.msra.mxu0 %v555
    %739 = vmatpush.bf16.msra.mxu0 %v553
    %740 = vmatpush.bf16.msra.mxu0 %v551
    %741 = vmatpush.bf16.msra.mxu0 %v549
    %742 = vmatpush.bf16.msra.mxu0 %v547
    %743 = vmatpush.bf16.msra.mxu0 %v545
    %744 = vmatmul.bf16.gmra.mxu0 %v95
    %v745 = vpop.f32.mrf.mxu0
    %v746 = vadd.f32 %v733, %v745
    %v747 = vpop.f32.mrf.mxu0
    %748 = vdwg.mxu0
    %749 = vmatpush.bf16.msra.mxu0 %v575
    %750 = vmatpush.bf16.msra.mxu0 %v573
    %751 = vmatpush.bf16.msra.mxu0 %v571
    %752 = vmatpush.bf16.msra.mxu0 %v569
    %753 = vmatpush.bf16.msra.mxu0 %v567
    %754 = vmatpush.bf16.msra.mxu0 %v565
    %755 = vmatpush.bf16.msra.mxu0 %v563
    %756 = vmatpush.bf16.msra.mxu0 %v561
    %757 = vmatmul.bf16.gmra.mxu0 %v96
    %v758 = vpop.f32.mrf.mxu0
    %v759 = vadd.f32 %v746, %v758
    %v760 = vpop.f32.mrf.mxu0
    %761 = vdwg.mxu0
    %762 = vmatpush.bf16.msra.mxu0 %v591
    %763 = vmatpush.bf16.msra.mxu0 %v589
    %764 = vmatpush.bf16.msra.mxu0 %v587
    %765 = vmatpush.bf16.msra.mxu0 %v585
    %766 = vmatpush.bf16.msra.mxu0 %v583
    %767 = vmatpush.bf16.msra.mxu0 %v581
    %768 = vmatpush.bf16.msra.mxu0 %v579
    %769 = vmatpush.bf16.msra.mxu0 %v577
    %770 = vmatmul.bf16.gmra.mxu0 %v97
    %v771 = vpop.f32.mrf.mxu0
    %v772 = vadd.f32 %v759, %v771
    %v773 = vpop.f32.mrf.mxu0
    %774 = vdwg.mxu0
    %775 = vmatpush.bf16.msra.mxu0 0
    %776 = vmatpush.bf16.msra.mxu0 0
    %777 = vmatpush.bf16.msra.mxu0 0
    %778 = vmatpush.bf16.msra.mxu0 0
    %779 = vmatpush.bf16.msra.mxu0 0
    %780 = vmatpush.bf16.msra.mxu0 0
    %781 = vmatpush.bf16.msra.mxu0 0
    %782 = vmatpush.bf16.msra.mxu0 %v593
    %783 = vmatmul.bf16.gmra.mxu0 %v695
    %v784 = vpop.f32.mrf.mxu0
    %v785 = vadd.f32 %v772, %v784
    %v786 = vpop.f32.mrf.mxu0
    %787 = vdwg.mxu0
    %788 = vmatpush.bf16.msra.mxu0 %v512
    %789 = vmatpush.bf16.msra.mxu0 %v510
    %790 = vmatpush.bf16.msra.mxu0 %v508
    %791 = vmatpush.bf16.msra.mxu0 %v506
    %792 = vmatpush.bf16.msra.mxu0 %v504
    %793 = vmatpush.bf16.msra.mxu0 %v502
    %794 = vmatpush.bf16.msra.mxu0 %v500
    %795 = vmatpush.bf16.msra.mxu0 %v498
    %796 = vmatmul.bf16.gmra.mxu0 %v92
    %v797 = vpop.f32.mrf.mxu0
    %v798 = vadd.f32 %v200, %v797
    %v799 = vpop.f32.mrf.mxu0
    %800 = vdwg.mxu0
    %801 = vmatpush.bf16.msra.mxu0 %v528
    %802 = vmatpush.bf16.msra.mxu0 %v526
    %803 = vmatpush.bf16.msra.mxu0 %v524
    %804 = vmatpush.bf16.msra.mxu0 %v522
    %805 = vmatpush.bf16.msra.mxu0 %v520
    %806 = vmatpush.bf16.msra.mxu0 %v518
    %807 = vmatpush.bf16.msra.mxu0 %v516
    %808 = vmatpush.bf16.msra.mxu0 %v514
    %809 = vmatmul.bf16.gmra.mxu0 %v93
    %v810 = vpop.f32.mrf.mxu0
    %v811 = vadd.f32 %v798, %v810
    %v812 = vpop.f32.mrf.mxu0
    %813 = vdwg.mxu0
    %814 = vmatpush.bf16.msra.mxu0 %v544
    %815 = vmatpush.bf16.msra.mxu0 %v542
    %816 = vmatpush.bf16.msra.mxu0 %v540
    %817 = vmatpush.bf16.msra.mxu0 %v538
    %818 = vmatpush.bf16.msra.mxu0 %v536
    %819 = vmatpush.bf16.msra.mxu0 %v534
    %820 = vmatpush.bf16.msra.mxu0 %v532
    %821 = vmatpush.bf16.msra.mxu0 %v530
    %822 = vmatmul.bf16.gmra.mxu0 %v94
    %v823 = vpop.f32.mrf.mxu0
    %v824 = vadd.f32 %v811, %v823
    %v825 = vpop.f32.mrf.mxu0
    %826 = vdwg.mxu0
    %827 = vmatpush.bf16.msra.mxu0 %v560
    %828 = vmatpush.bf16.msra.mxu0 %v558
    %829 = vmatpush.bf16.msra.mxu0 %v556
    %830 = vmatpush.bf16.msra.mxu0 %v554
    %831 = vmatpush.bf16.msra.mxu0 %v552
    %832 = vmatpush.bf16.msra.mxu0 %v550
    %833 = vmatpush.bf16.msra.mxu0 %v548
    %834 = vmatpush.bf16.msra.mxu0 %v546
    %835 = vmatmul.bf16.gmra.mxu0 %v95
    %v836 = vpop.f32.mrf.mxu0
    %v837 = vadd.f32 %v824, %v836
    %v838 = vpop.f32.mrf.mxu0
    %839 = vdwg.mxu0
    %840 = vmatpush.bf16.msra.mxu0 %v576
    %841 = vmatpush.bf16.msra.mxu0 %v574
    %842 = vmatpush.bf16.msra.mxu0 %v572
    %843 = vmatpush.bf16.msra.mxu0 %v570
    %844 = vmatpush.bf16.msra.mxu0 %v568
    %845 = vmatpush.bf16.msra.mxu0 %v566
    %846 = vmatpush.bf16.msra.mxu0 %v564
    %847 = vmatpush.bf16.msra.mxu0 %v562
    %848 = vmatmul.bf16.gmra.mxu0 %v96
    %v849 = vpop.f32.mrf.mxu0
    %v850 = vadd.f32 %v837, %v849
    %v851 = vpop.f32.mrf.mxu0
    %852 = vdwg.mxu0
    %853 = vmatpush.bf16.msra.mxu0 %v592
    %854 = vmatpush.bf16.msra.mxu0 %v590
    %855 = vmatpush.bf16.msra.mxu0 %v588
    %856 = vmatpush.bf16.msra.mxu0 %v586
    %857 = vmatpush.bf16.msra.mxu0 %v584
    %858 = vmatpush.bf16.msra.mxu0 %v582
    %859 = vmatpush.bf16.msra.mxu0 %v580
    %860 = vmatpush.bf16.msra.mxu0 %v578
    %861 = vmatmul.bf16.gmra.mxu0 %v97
    %v862 = vpop.f32.mrf.mxu0
    %v863 = vadd.f32 %v850, %v862
    %v864 = vpop.f32.mrf.mxu0
    %865 = vdwg.mxu0
    %866 = vmatpush.bf16.msra.mxu0 0
    %867 = vmatpush.bf16.msra.mxu0 0
    %868 = vmatpush.bf16.msra.mxu0 0
    %869 = vmatpush.bf16.msra.mxu0 0
    %870 = vmatpush.bf16.msra.mxu0 0
    %871 = vmatpush.bf16.msra.mxu0 0
    %872 = vmatpush.bf16.msra.mxu0 0
    %873 = vmatpush.bf16.msra.mxu0 %v594
    %874 = vmatmul.bf16.gmra.mxu0 %v695
    %v875 = vpop.f32.mrf.mxu0
    %v876 = vadd.f32 %v863, %v875
    %v877 = vpop.f32.mrf.mxu0
    %878 = vdwg.mxu0
    %v879 = vmax.f32 %v785, 0.0
    %v880 = vmax.f32 %v876, 0.0
    %v881 = vpack.c.bf16 %v879, %v879
    %v882 = vpack.c.bf16 %v880, %v880
    %v883 = vld [vmem:[#allocation7] sm:$0xf]
    %v884 = vld [vmem:[#allocation7 + $0x4] sm:$0xf]
    %v885 = vld [vmem:[#allocation7 + $0x8] sm:$0xf]
    %v886 = vld [vmem:[#allocation7 + $0xc] sm:$0xf]
    %v887 = vld [vmem:[#allocation7 + $0x10] sm:$0xf]
    %v888 = vld [vmem:[#allocation7 + $0x14] sm:$0xf]
    %v889 = vld [vmem:[#allocation7 + $0x18] sm:$0xf]
    %v890 = vld [vmem:[#allocation7 + $0x1c] sm:$0xf]
    %v891 = vld [vmem:[#allocation7 + $0x20] sm:$0xf]
    %v892 = vld [vmem:[#allocation7 + $0x24] sm:$0xf]
    %v893 = vld [vmem:[#allocation7 + $0x28] sm:$0xf]
    %v894 = vld [vmem:[#allocation7 + $0x2c] sm:$0xf]
    %v895 = vld [vmem:[#allocation7 + $0x30] sm:$0xf]
    %v896 = vld [vmem:[#allocation7 + $0x34] sm:$0xf]
    %v897 = vld [vmem:[#allocation7 + $0x38] sm:$0xf]
    %v898 = vld [vmem:[#allocation7 + $0x3c] sm:$0xf]
    %v899 = vld [vmem:[#allocation7 + $0x40] sm:$0xf]
    %v900 = vld [vmem:[#allocation7 + $0x44] sm:$0xf]
    %v901 = vld [vmem:[#allocation7 + $0x48] sm:$0xf]
    %v902 = vld [vmem:[#allocation7 + $0x4c] sm:$0xf]
    %v903 = vld [vmem:[#allocation7 + $0x50] sm:$0xf]
    %v904 = vld [vmem:[#allocation7 + $0x54] sm:$0xf]
    %v905 = vld [vmem:[#allocation7 + $0x58] sm:$0xf]
    %v906 = vld [vmem:[#allocation7 + $0x5c] sm:$0xf]
    %v907 = vld [vmem:[#allocation7 + $0x60] sm:$0xf]
    %v908 = vld [vmem:[#allocation7 + $0x64] sm:$0xf]
    %v909 = vld [vmem:[#allocation7 + $0x68] sm:$0xf]
    %v910 = vld [vmem:[#allocation7 + $0x6c] sm:$0xf]
    %v911 = vld [vmem:[#allocation7 + $0x70] sm:$0xf]
    %v912 = vld [vmem:[#allocation7 + $0x74] sm:$0xf]
    %v913 = vld [vmem:[#allocation7 + $0x78] sm:$0xf]
    %v914 = vld [vmem:[#allocation7 + $0x7c] sm:$0xf]
    %v915 = vld [vmem:[%s4] sm:$0x1]
    %v917 = vperm.slane %v915, 0
    %v951 = vunpack.c.l.b16 %v883
    %v952 = vunpack.c.l.b16 %v884
    %v953 = vunpack.c.l.b16 %v885
    %v954 = vunpack.c.l.b16 %v886
    %v955 = vunpack.c.l.b16 %v887
    %v956 = vunpack.c.l.b16 %v888
    %v957 = vunpack.c.l.b16 %v889
    %v958 = vunpack.c.l.b16 %v890
    %v959 = vunpack.c.l.b16 %v891
    %v960 = vunpack.c.l.b16 %v892
    %v961 = vunpack.c.l.b16 %v893
    %v962 = vunpack.c.l.b16 %v894
    %v963 = vunpack.c.l.b16 %v895
    %v964 = vunpack.c.l.b16 %v896
    %v965 = vunpack.c.l.b16 %v897
    %v966 = vunpack.c.l.b16 %v898
    %v967 = vunpack.c.l.b16 %v899
    %v968 = vunpack.c.l.b16 %v900
    %v969 = vunpack.c.l.b16 %v901
    %v970 = vunpack.c.l.b16 %v902
    %v971 = vunpack.c.l.b16 %v903
    %v972 = vunpack.c.l.b16 %v904
    %v973 = vunpack.c.l.b16 %v905
    %v974 = vunpack.c.l.b16 %v906
    %v975 = vunpack.c.l.b16 %v907
    %v976 = vunpack.c.l.b16 %v908
    %v977 = vunpack.c.l.b16 %v909
    %v978 = vunpack.c.l.b16 %v910
    %v979 = vunpack.c.l.b16 %v911
    %v980 = vunpack.c.l.b16 %v912
    %v981 = vunpack.c.l.b16 %v913
    %v982 = vunpack.c.l.b16 %v914
    %v983 = vpack.c.b16 %v952, %v951
    %v984 = vpack.c.b16 %v954, %v953
    %v985 = vpack.c.b16 %v956, %v955
    %v986 = vpack.c.b16 %v958, %v957
    %v987 = vpack.c.b16 %v960, %v959
    %v988 = vpack.c.b16 %v962, %v961
    %v989 = vpack.c.b16 %v964, %v963
    %v990 = vpack.c.b16 %v966, %v965
    %v991 = vpack.c.b16 %v968, %v967
    %v992 = vpack.c.b16 %v970, %v969
    %v993 = vpack.c.b16 %v972, %v971
    %v994 = vpack.c.b16 %v974, %v973
    %v995 = vpack.c.b16 %v976, %v975
    %v996 = vpack.c.b16 %v978, %v977
    %v997 = vpack.c.b16 %v980, %v979
    %v998 = vpack.c.b16 %v982, %v981
    %1015 = vmatpush.bf16.msra.mxu0 %v990
    %1016 = vmatpush.bf16.msra.mxu0 %v989
    %1017 = vmatpush.bf16.msra.mxu0 %v988
    %1018 = vmatpush.bf16.msra.mxu0 %v987
    %1019 = vmatpush.bf16.msra.mxu0 %v986
    %1020 = vmatpush.bf16.msra.mxu0 %v985
    %1021 = vmatpush.bf16.msra.mxu0 %v984
    %1022 = vmatpush.bf16.msra.mxu0 %v983
    %1023 = vmatmul.bf16.gmra.mxu0 %v881
    %v1024 = vpop.f32.mrf.mxu0
    %v1025 = vadd.f32 %v917, %v1024
    %v1026 = vpop.f32.mrf.mxu0
    %1027 = vdwg.mxu0
    %1028 = vmatpush.bf16.msra.mxu0 %v998
    %1029 = vmatpush.bf16.msra.mxu0 %v997
    %1030 = vmatpush.bf16.msra.mxu0 %v996
    %1031 = vmatpush.bf16.msra.mxu0 %v995
    %1032 = vmatpush.bf16.msra.mxu0 %v994
    %1033 = vmatpush.bf16.msra.mxu0 %v993
    %1034 = vmatpush.bf16.msra.mxu0 %v992
    %1035 = vmatpush.bf16.msra.mxu0 %v991
    %1036 = vmatmul.bf16.gmra.mxu0 %v882
    %v1037 = vpop.f32.mrf.mxu0
    %v1038 = vadd.f32 %v1025, %v1037
    %v1039 = vpop.f32.mrf.mxu0
    %1040 = vdwg.mxu0
    %v1041 = vmax.f32 %v1038, 0.0
    %v1042 = vpack.c.bf16 %v1041, %v1041
    %v1043 = vld [vmem:[%s5] sm:$0xf]
    %v1044 = vld [vmem:[%s5 + $0x4] sm:$0xf]
    %v1045 = vld [vmem:[%s5 + $0x8] sm:$0xf]
    %v1046 = vld [vmem:[%s5 + $0xc] sm:$0xf]
    %v1047 = vld [vmem:[%s5 + $0x10] sm:$0xf]
    %v1048 = vld [vmem:[%s5 + $0x14] sm:$0xf]
    %v1049 = vld [vmem:[%s5 + $0x18] sm:$0xf]
    %v1050 = vld [vmem:[%s5 + $0x1c] sm:$0xf]
    %v1051 = vld [vmem:[%s5 + $0x20] sm:$0xf]
    %v1052 = vld [vmem:[%s5 + $0x24] sm:$0xf]
    %v1053 = vld [vmem:[%s5 + $0x28] sm:$0xf]
    %v1054 = vld [vmem:[%s5 + $0x2c] sm:$0xf]
    %v1055 = vld [vmem:[%s5 + $0x30] sm:$0xf]
    %v1056 = vld [vmem:[%s5 + $0x34] sm:$0xf]
    %v1057 = vld [vmem:[%s5 + $0x38] sm:$0xf]
    %v1058 = vld [vmem:[%s5 + $0x3c] sm:$0xf]
    %v1059 = vld [vmem:[%s6] sm:$0x1]
    %v1061 = vperm.slane %v1059, 0
    %v1079 = vunpack.c.l.b16 %v1043
    %v1080 = vunpack.c.l.b16 %v1044
    %v1081 = vunpack.c.l.b16 %v1045
    %v1082 = vunpack.c.l.b16 %v1046
    %v1083 = vunpack.c.l.b16 %v1047
    %v1084 = vunpack.c.l.b16 %v1048
    %v1085 = vunpack.c.l.b16 %v1049
    %v1086 = vunpack.c.l.b16 %v1050
    %v1087 = vunpack.c.l.b16 %v1051
    %v1088 = vunpack.c.l.b16 %v1052
    %v1089 = vunpack.c.l.b16 %v1053
    %v1090 = vunpack.c.l.b16 %v1054
    %v1091 = vunpack.c.l.b16 %v1055
    %v1092 = vunpack.c.l.b16 %v1056
    %v1093 = vunpack.c.l.b16 %v1057
    %v1094 = vunpack.c.l.b16 %v1058
    %v1095 = vpack.c.b16 %v1080, %v1079
    %v1096 = vpack.c.b16 %v1082, %v1081
    %v1097 = vpack.c.b16 %v1084, %v1083
    %v1098 = vpack.c.b16 %v1086, %v1085
    %v1099 = vpack.c.b16 %v1088, %v1087
    %v1100 = vpack.c.b16 %v1090, %v1089
    %v1101 = vpack.c.b16 %v1092, %v1091
    %v1102 = vpack.c.b16 %v1094, %v1093
    %1111 = vmatpush.bf16.msra.mxu0 %v1102
    %1112 = vmatpush.bf16.msra.mxu0 %v1101
    %1113 = vmatpush.bf16.msra.mxu0 %v1100
    %1114 = vmatpush.bf16.msra.mxu0 %v1099
    %1115 = vmatpush.bf16.msra.mxu0 %v1098
    %1116 = vmatpush.bf16.msra.mxu0 %v1097
    %1117 = vmatpush.bf16.msra.mxu0 %v1096
    %1118 = vmatpush.bf16.msra.mxu0 %v1095
    %1119 = vmatmul.bf16.gmra.mxu0 %v1042
    %v1120 = vpop.f32.mrf.mxu0
    %v1121 = vadd.f32 %v1061, %v1120
    %v1122 = vpop.f32.mrf.mxu0
    %1123 = vdwg.mxu0
    %v1124 = vmax.f32 %v1121, 0.0
    %v1125 = vpack.c.bf16 %v1124, %v1124
    %v1126 = vld [vmem:[%s7] sm:$0xf]
    %v1127 = vld [vmem:[%s7 + $0x4] sm:$0xf]
    %v1128 = vld [vmem:[%s7 + $0x8] sm:$0xf]
    %v1129 = vld [vmem:[%s7 + $0xc] sm:$0xf]
    %v1130 = vld [vmem:[%s7 + $0x10] sm:$0xf]
    %v1131 = vld [vmem:[%s7 + $0x14] sm:$0xf]
    %v1132 = vld [vmem:[%s7 + $0x18] sm:$0xf]
    %v1133 = vld [vmem:[%s7 + $0x1c] sm:$0xf]
    %v1134 = vld [vmem:[%s7 + $0x20] sm:$0xf]
    %v1135 = vld [vmem:[%s7 + $0x24] sm:$0xf]
    %v1136 = vld [vmem:[%s7 + $0x28] sm:$0xf]
    %v1137 = vld [vmem:[%s7 + $0x2c] sm:$0xf]
    %v1138 = vld [vmem:[%s7 + $0x30] sm:$0xf]
    %v1139 = vld [vmem:[%s7 + $0x34] sm:$0xf]
    %v1140 = vld [vmem:[%s7 + $0x38] sm:$0xf]
    %v1141 = vld [vmem:[%s7 + $0x3c] sm:$0xf]
    %v1142 = vld [vmem:[%s8] sm:$0x1]
    %v1144 = vperm.slane %v1142, 0
    %v1162 = vunpack.c.l.b16 %v1126
    %v1163 = vunpack.c.l.b16 %v1127
    %v1164 = vunpack.c.l.b16 %v1128
    %v1165 = vunpack.c.l.b16 %v1129
    %v1166 = vunpack.c.l.b16 %v1130
    %v1167 = vunpack.c.l.b16 %v1131
    %v1168 = vunpack.c.l.b16 %v1132
    %v1169 = vunpack.c.l.b16 %v1133
    %v1170 = vunpack.c.l.b16 %v1134
    %v1171 = vunpack.c.l.b16 %v1135
    %v1172 = vunpack.c.l.b16 %v1136
    %v1173 = vunpack.c.l.b16 %v1137
    %v1174 = vunpack.c.l.b16 %v1138
    %v1175 = vunpack.c.l.b16 %v1139
    %v1176 = vunpack.c.l.b16 %v1140
    %v1177 = vunpack.c.l.b16 %v1141
    %v1178 = vpack.c.b16 %v1163, %v1162
    %v1179 = vpack.c.b16 %v1165, %v1164
    %v1180 = vpack.c.b16 %v1167, %v1166
    %v1181 = vpack.c.b16 %v1169, %v1168
    %v1182 = vpack.c.b16 %v1171, %v1170
    %v1183 = vpack.c.b16 %v1173, %v1172
    %v1184 = vpack.c.b16 %v1175, %v1174
    %v1185 = vpack.c.b16 %v1177, %v1176
    %1194 = vmatpush.bf16.msra.mxu0 %v1185
    %1195 = vmatpush.bf16.msra.mxu0 %v1184
    %1196 = vmatpush.bf16.msra.mxu0 %v1183
    %1197 = vmatpush.bf16.msra.mxu0 %v1182
    %1198 = vmatpush.bf16.msra.mxu0 %v1181
    %1199 = vmatpush.bf16.msra.mxu0 %v1180
    %1200 = vmatpush.bf16.msra.mxu0 %v1179
    %1201 = vmatpush.bf16.msra.mxu0 %v1178
    %1202 = vmatmul.bf16.gmra.mxu0 %v1125
    %v1203 = vpop.f32.mrf.mxu0
    %v1204 = vadd.f32 %v1144, %v1203
    %v1205 = vpop.f32.mrf.mxu0
    %1206 = vdwg.mxu0
    %v1207 = vmax.f32 %v1204, 0.0
    %v1208 = vpack.c.bf16 %v1207, %v1207
    %v1209 = vld [vmem:[%s9] sm:$0xf]
    %v1210 = vld [vmem:[%s9 + $0x4] sm:$0xf]
    %v1211 = vld [vmem:[%s9 + $0x8] sm:$0xf]
    %v1212 = vld [vmem:[%s9 + $0xc] sm:$0xf]
    %v1213 = vld [vmem:[%s9 + $0x10] sm:$0xf]
    %v1214 = vld [vmem:[%s9 + $0x14] sm:$0xf]
    %v1215 = vld [vmem:[%s9 + $0x18] sm:$0xf]
    %v1216 = vld [vmem:[%s9 + $0x1c] sm:$0xf]
    %v1217 = vld [vmem:[%s10] sm:$0x1]
    %v1219 = vperm.slane %v1217, 0
    %v1229 = vunpack.c.l.b16 %v1209
    %v1230 = vunpack.c.l.b16 %v1210
    %v1231 = vunpack.c.l.b16 %v1211
    %v1232 = vunpack.c.l.b16 %v1212
    %v1233 = vunpack.c.l.b16 %v1213
    %v1234 = vunpack.c.l.b16 %v1214
    %v1235 = vunpack.c.l.b16 %v1215
    %v1236 = vunpack.c.l.b16 %v1216
    %v1237 = vpack.c.b16 %v1230, %v1229
    %v1238 = vpack.c.b16 %v1232, %v1231
    %v1239 = vpack.c.b16 %v1234, %v1233
    %v1240 = vpack.c.b16 %v1236, %v1235
    %vm1245 = vcmask 523264
    %v1247 = vsel %vm1245, %v1208, 0
    %1249 = vmatpush.bf16.msra.mxu0 0
    %1250 = vmatpush.bf16.msra.mxu0 0
    %1251 = vmatpush.bf16.msra.mxu0 0
    %1252 = vmatpush.bf16.msra.mxu0 0
    %1253 = vmatpush.bf16.msra.mxu0 %v1240
    %1254 = vmatpush.bf16.msra.mxu0 %v1239
    %1255 = vmatpush.bf16.msra.mxu0 %v1238
    %1256 = vmatpush.bf16.msra.mxu0 %v1237
    %1257 = vmatmul.bf16.gmra.mxu0 %v1247
    %v1258 = vpop.f32.mrf.mxu0
    %v1259 = vadd.f32 %v1219, %v1258
    %v1260 = vpop.f32.mrf.mxu0
    %1261 = vdwg.mxu0
    %1262 = vst [vmem:[#allocation8] sm:$0xff] %v1259
    // Predicated region
    $region58: #{tpu_custom_call.1} parent=1 // pred_check
      _
    $region59: #{tpu_custom_call.1} parent=1 // pred_check_branch
      %1264 = sbr.rel (0) target = $region61
    $region60: #{tpu_custom_call.1} parent=1 // pred_region
      %1266 = vsyncadd [#allocation4], 0
      %s1268 = sshll.u32 [#allocation8], 4
      %s1269 = int_to_ptr.vmem [resolvable:$true] %s1268
      %s1270 = sshll.u32 %s11, 4
      %s1271 = int_to_ptr.hbm [resolvable:$true] %s1270
      %1273 = dma.vmem_to_hbm [thread:$0]  %s1269, 128, %s1271, [#allocation4]
    $region61: #{tpu_custom_call.1} parent=1 // pred_fallthru
      _
    // Predicated region
    $region62: #{tpu_custom_call.1} parent=1 // pred_check
      _
    $region63: #{tpu_custom_call.1} parent=1 // pred_check_branch
      %1275 = sbr.rel (0) target = $region65
    $region64: #{tpu_custom_call.1} parent=1 // pred_region
      %1277 = dma.done [#allocation4], 128
    $region65: #{tpu_custom_call.1} parent=1 // pred_fallthru
      _
    %1278 = vsyncpa [#allocation3], 1
    %1279 = vsyncpa [#allocation6], 1
    %1280 = vsyncpa [#allocation4], 1

</llo_original>
